<compile_context>
chip_gen: v7x
topology: tpu7x:2x2x1
jax: 0.10.0
libtpu: 0.0.40
codegen_flags: <defaults>
</compile_context>

<pallas_src>
from functools import partial

import jax
import jax.numpy as jnp
from jax.experimental import pallas as pl
from jax.experimental.pallas import tpu as pltpu

_LANE = 128
_SUBLANE_BF16 = 16  # bf16 packs 2 rows per 32-bit sublane


def _round_up(x, m):
    return ((x + m - 1) // m) * m


# ----------------------------- Pallas kernel --------------------------------
def _fc_kernel(f_ref, w_ref, b_ref, o_ref):
    # f_ref: [TB, H]  bf16 CLS feature tile
    # w_ref: [H,  TN] bf16 fc weight tile (pre-transposed, class-padded)
    # b_ref: [1,  TN] f32 bias tile
    # o_ref: [TB, TN] f32 logits tile (lane-dense)
    acc = jnp.dot(f_ref[...], w_ref[...],
                  preferred_element_type=jnp.float32)  # bf16 MXU, f32 accumulate
    o_ref[...] = (acc + b_ref[...]).astype(o_ref.dtype)


# --------------------- one-time fc parameter preparation --------------------
def prepare_fc_params(fc_w, fc_b):
    """Pad classes to a multiple of 128 and cast the weight to bf16.

    Done ONCE at init (not per forward call), so the per-call kernel sees
    lane-dense, already-padded parameters with no wrapper-side pad traffic.

    fc_w: [H, C] fc weight stored pre-transposed (== torch weight.T)
    fc_b: [C]    fc bias
    returns (w_padded [H, Cp] bf16, b_padded [1, Cp] f32)
    """
    H, C = fc_w.shape
    Cp = _round_up(C, _LANE)
    wp = jnp.pad(fc_w, ((0, 0), (0, Cp - C))).astype(jnp.bfloat16)
    bp = jnp.pad(fc_b, ((0, Cp - C),)).astype(jnp.float32).reshape(1, Cp)
    return wp, bp


# ------------------------------- Pallas head ---------------------------------
def linear_classifier_head(features, w_padded, b_padded, num_classes,
                           *, block_b=512, block_n=1024):
    """logits = features @ w + b   (batch / class tiled Pallas kernel).

    features: [B, H]  CLS-token features (any float dtype; cast to bf16 here)
    w_padded: [H, Cp] bf16, Cp multiple of 128 (from prepare_fc_params)
    b_padded: [1, Cp] f32
    """
    B, H = features.shape
    Hw, Cp = w_padded.shape
    assert Hw == H and Cp % _LANE == 0

    f = features.astype(jnp.bfloat16)

    # Batch tile: multiple of 16 (bf16 sublane packing), or the full (tiny) batch.
    if B <= _SUBLANE_BF16:
        TB = B                                   # full-extent block, no padding needed
    else:
        TB = min(block_b, (B // _SUBLANE_BF16) * _SUBLANE_BF16)
        if B >= 2 * _SUBLANE_BF16:
            # v7x has 2 TensorCores: keep >= 2 grid steps on the parallel axis.
            TB = min(TB, _round_up(pl.cdiv(B, 2), _SUBLANE_BF16))
    grid_b = pl.cdiv(B, TB)

    # Class tile: lane-dense multiple of 128; resident weight when Cp is small.
    TN = min(block_n, Cp)
    grid_n = pl.cdiv(Cp, TN)

    # Explicit scoped-VMEM budget: double-buffered tiles + bias + headroom.
    vmem_bytes = (2 * TB * H * 2        # features, bf16, double-buffered
                  + 2 * H * TN * 2      # weight,   bf16, double-buffered
                  + 2 * 1 * TN * 4      # bias,     f32,  double-buffered
                  + 2 * TB * TN * 4)    # logits,   f32,  double-buffered
    vmem_limit = int(min(64 * 2**20, max(16 * 2**20, 2 * vmem_bytes + 4 * 2**20)))

    out = pl.pallas_call(
        _fc_kernel,
        out_shape=jax.ShapeDtypeStruct((B, Cp), jnp.float32),
        grid=(grid_b, grid_n),
        in_specs=[
            pl.BlockSpec((TB, H), lambda i, j: (i, 0)),   # feature tile (reused over j)
            pl.BlockSpec((H, TN), lambda i, j: (0, j)),   # weight tile
            pl.BlockSpec((1, TN), lambda i, j: (0, j)),   # bias tile
        ],
        out_specs=pl.BlockSpec((TB, TN), lambda i, j: (i, j)),
        compiler_params=pltpu.CompilerParams(
            dimension_semantics=("parallel", "parallel"),
            vmem_limit_bytes=vmem_limit,
        ),
    )(f, w_padded, b_padded)

    # Only the class padding needs slicing off (batch was never padded).
    return out[:, :num_classes]


# --------------------- deterministic stand-in encoder -----------------------
# TODO(synk): the real `encoder` is an external pretrained transformer; only a
# minimal deterministic patch-embed + CLS-token stand-in is provided here.
def toy_encoder(x, params, patch):
    """x: NCHW [B, C, H, W] -> last_hidden_state [B, 1 + num_patches, hidden]."""
    B, C, H, W = x.shape
    p = patch  # static Python int
    hidden = params["proj_w"].shape[1]
    x = x.reshape(B, C, H // p, p, W // p, p)
    x = jnp.transpose(x, (0, 2, 4, 1, 3, 5)).reshape(
        B, (H // p) * (W // p), C * p * p)
    tokens = jnp.tanh(x @ params["proj_w"] + params["proj_b"])      # [B, N, hidden]
    cls = jnp.broadcast_to(params["cls"], (B, 1, hidden))
    last_hidden_state = jnp.concatenate([cls, tokens], axis=1)      # [B, 1+N, hidden]
    # torch.no_grad() equivalent for the encoder pass
    return jax.lax.stop_gradient(last_hidden_state)


# ------------------------------- full model ---------------------------------
@partial(jax.jit, static_argnames=("patch", "num_classes"))
def linear_classifier_forward(x, enc_params, fc_wp, fc_bp, *, patch, num_classes):
    last_hidden_state = toy_encoder(x, enc_params, patch)   # [B, S, hidden]
    # CLS-token extraction as a cheap XLA slice so only [B, H] reaches Pallas.
    cls = last_hidden_state[:, 0, :]                          # [B, hidden]
    return linear_classifier_head(cls, fc_wp, fc_bp, num_classes)


if __name__ == "__main__":
    # Small shapes consistent with the forward pass (CIFAR-like NCHW image).
    B, C, H, W = 2, 3, 16, 16
    patch = 4
    hidden = 32                     # encoder.config.hidden_size
    num_classes = 10

    key = jax.random.PRNGKey(0)
    k_x, k_pw, k_pb, k_cls, k_w, k_b = jax.random.split(key, 6)

    x = jax.random.normal(k_x, (B, C, H, W), dtype=jnp.float32)

    enc_params = {
        "proj_w": jax.random.normal(k_pw, (C * patch * patch, hidden), jnp.float32) * 0.05,
        "proj_b": jax.random.normal(k_pb, (hidden,), jnp.float32) * 0.01,
        "cls": jax.random.normal(k_cls, (1, 1, hidden), jnp.float32) * 0.02,
    }

    # fc = nn.Linear(hidden, num_classes); stored pre-transposed [hidden, num_classes]
    fc_w = jax.random.normal(k_w, (hidden, num_classes), jnp.float32) * 0.05
    fc_b = jax.random.normal(k_b, (num_classes,), jnp.float32) * 0.01

    # One-time parameter prep (padding + bf16 cast hoisted out of the forward).
    fc_wp, fc_bp = prepare_fc_params(fc_w, fc_b)
    fc_wp, fc_bp = jax.block_until_ready((fc_wp, fc_bp))

    logits = linear_classifier_forward(x, enc_params, fc_wp, fc_bp,
                                       patch=patch, num_classes=num_classes)
    jax.block_until_ready(logits)

    # Reference check against plain f32 JAX (tolerance loosened for bf16 inputs).
    hs = toy_encoder(x, enc_params, patch)
    ref = hs[:, 0] @ fc_w + fc_b
    assert logits.shape == (B, num_classes)
    assert jnp.allclose(logits, ref, atol=2e-2, rtol=2e-2)

    print("KERNEL_OK")
</pallas_src>

<mosaic_0001>
module attributes {stable_mosaic.version = 11 : i64} {
  func.func @_fc_kernel(%arg0: i32, %arg1: i32, %arg2: memref<2x32xbf16, #tpu.memory_space<vmem>>, %arg3: memref<32x128xbf16, #tpu.memory_space<vmem>>, %arg4: memref<1x128xf32, #tpu.memory_space<vmem>>, %arg5: memref<2x128xf32, #tpu.memory_space<vmem>>) attributes {dimension_semantics = [#tpu.dimension_semantics<parallel>, #tpu.dimension_semantics<parallel>], iteration_bounds = array<i64: 1, 1>, scalar_prefetch = 0 : i64, scratch_operands = 0 : i64, tpu.core_type = #tpu.core_type<tc>, window_params = [{transform_indices = @transform_0, window_bounds = array<i64: 2, 32>}, {transform_indices = @transform_1, window_bounds = array<i64: 32, 128>}, {transform_indices = @transform_2, window_bounds = array<i64: 1, 128>}, {transform_indices = @transform_3, window_bounds = array<i64: 2, 128>}]} {
    %c0 = arith.constant 0 : index
    %c0_0 = arith.constant 0 : index
    %0 = vector.load %arg2[%c0, %c0_0] : memref<2x32xbf16, #tpu.memory_space<vmem>>, vector<2x32xbf16>
    %c0_1 = arith.constant 0 : index
    %c0_2 = arith.constant 0 : index
    %1 = vector.load %arg3[%c0_1, %c0_2] : memref<32x128xbf16, #tpu.memory_space<vmem>>, vector<32x128xbf16>
    %cst = arith.constant dense<0.000000e+00> : vector<2x128xf32>
    %2 = tpu.matmul %0, %1, %cst {dimension_numbers = #tpu.dot_dimension_numbers<[1], [0], [0], [1], [0, 0, 1, 1], [], []>} : vector<2x32xbf16>, vector<32x128xbf16>, vector<2x128xf32> -> vector<2x128xf32>
    %c0_3 = arith.constant 0 : index
    %c0_4 = arith.constant 0 : index
    %3 = vector.load %arg4[%c0_3, %c0_4] : memref<1x128xf32, #tpu.memory_space<vmem>>, vector<1x128xf32>
    %4 = vector.broadcast %3 : vector<1x128xf32> to vector<2x128xf32>
    %5 = arith.addf %2, %4 : vector<2x128xf32>
    %c0_5 = arith.constant 0 : index
    %c0_6 = arith.constant 0 : index
    %6 = vector.load %arg5[%c0_5, %c0_6] : memref<2x128xf32, #tpu.memory_space<vmem>>, vector<2x128xf32>
    tpu.vector_store %arg5[%c0_5, %c0_6], %5 {strides = array<i32>} : memref<2x128xf32, #tpu.memory_space<vmem>>, vector<2x128xf32>,
    return
  }
  func.func @transform_0(%arg0: i32, %arg1: i32) -> (i32, i32) {
    %c0_i32 = arith.constant 0 : i32
    %c0_i32_0 = arith.constant 0 : i32
    return %arg0, %c0_i32 : i32, i32
  }
  func.func @transform_1(%arg0: i32, %arg1: i32) -> (i32, i32) {
    %c0_i32 = arith.constant 0 : i32
    %c0_i32_0 = arith.constant 0 : i32
    return %c0_i32, %arg1 : i32, i32
  }
  func.func @transform_2(%arg0: i32, %arg1: i32) -> (i32, i32) {
    %c0_i32 = arith.constant 0 : i32
    %c0_i32_0 = arith.constant 0 : i32
    return %c0_i32, %arg1 : i32, i32
  }
  func.func @transform_3(%arg0: i32, %arg1: i32) -> (i32, i32) {
    %c0_i32 = arith.constant 0 : i32
    return %arg0, %arg1 : i32, i32
  }
}

</mosaic_0001>

<llo_original>
// kernel: linear_classifier_forward.1
$region0: #{linear_classifier_forward.1}
  #allocation0 [shape = 'u32[]', space=smem, size = 0x4, offset = 0x4, fixed_abs, tag = 'smem constant byte address 0x4 - core index']
  #allocation1 [shape = 'u32[144,128]{1,0:T(1,128)}', space=vmem, size = 0x12000, scoped, tag = 'internal scratch']
  %s0 = inlined_call_operand.vmem [shape: bf16[2,32], index: 0, kind: input, shape index: {}]
  %s1 = inlined_call_operand.vmem [shape: bf16[32,128], index: 1, kind: input, shape index: {}]
  %s2 = inlined_call_operand.vmem [shape: f32[1,128], index: 2, kind: input, shape index: {}]
  %s3 = inlined_call_operand.hbm [shape: f32[2,128], index: 3, kind: output, shape index: {}]
  %s4 = sld [smem:[#allocation0]]
  $region22: #{linear_classifier_forward.1} parent=0
    _
  %s6 = ssub.s32 1, %s4
  %s7 = scalar_select 0, %s6, %s4
  $region1: #{linear_classifier_forward.1} parent=0
    #allocation2 [shape = 'u8[1024]{0}', space=vmem, size = 0x400, scoped, tag = 'output window, operand 0, single buffered']
    #allocation3 [shape = 's32[1]{0}', space=sflag, size = 0x4, scoped, tag = 'scoped memory for linear_classifier_forward.1']
    %8 = vsyncpa [#allocation3], 0
    // Predicated region
    $region2: #{linear_classifier_forward.1} parent=1 // pred_check
      _
    $region3: #{linear_classifier_forward.1} parent=1 // pred_check_branch
      %10 = sbr.rel (0) target = $region5
    $region4: #{linear_classifier_forward.1} parent=1 // pred_region
      _
    $region5: #{linear_classifier_forward.1} parent=1 // pred_fallthru
      _
    // Predicated region
    $region6: #{linear_classifier_forward.1} parent=1 // pred_check
      _
    $region7: #{linear_classifier_forward.1} parent=1 // pred_check_branch
      %12 = sbr.rel (0) target = $region9
    $region8: #{linear_classifier_forward.1} parent=1 // pred_region
      _
    $region9: #{linear_classifier_forward.1} parent=1 // pred_fallthru
      _
    // Predicated region
    $region10: #{linear_classifier_forward.1} parent=1 // pred_check
      _
    $region11: #{linear_classifier_forward.1} parent=1 // pred_check_branch
      %14 = sbr.rel (0) target = $region13
    $region12: #{linear_classifier_forward.1} parent=1 // pred_region
      _
    $region13: #{linear_classifier_forward.1} parent=1 // pred_fallthru
      _
    %v16 = vld [vmem:[%s0] sm:$0x1]
    %v17 = vld [vmem:[%s1] sm:$0xf]
    %v18 = vld [vmem:[%s1 + $0x4] sm:$0xf]
    %v19 = vld [vmem:[%s1 + $0x8] sm:$0xf]
    %v20 = vld [vmem:[%s1 + $0xc] sm:$0xf]
    %v21 = vld [vmem:[%s2] sm:$0x1]
    %v23 = vlaneseq
    %v24 = vshrl.u32 %v23, 7
    %v25 = vsub.s32 0, %v24
    %v26 = vrot.slane %v21, %v25
    %v32 = vunpack.c.l.b16 %v17
    %v33 = vunpack.c.l.b16 %v18
    %v34 = vunpack.c.l.b16 %v19
    %v35 = vunpack.c.l.b16 %v20
    %v36 = vpack.c.b16 %v33, %v32
    %v37 = vpack.c.b16 %v35, %v34
    %vm40 = vcmask 261120
    %v42 = vsel %vm40, %v16, 0
    %44 = vmatprep.subr.bf16.mxu0 0
    %45 = vmatpush1.bf16.msra.mxu0 %v36
    %46 = vmatprep.subr.bf16.mxu0 0
    %47 = vmatpush1.bf16.msra.mxu0 %v37
    %48 = vmatprep.subr.bf16.mxu0 0
    %49 = vmatpush1.bf16.msra.mxu0 0
    %50 = vmatprep.subr.bf16.mxu0 0
    %51 = vmatpush1.bf16.msra.mxu0 0
    %52 = vmatprep.subr.bf16.mxu0 0
    %53 = vmatpush1.bf16.msra.mxu0 0
    %54 = vmatprep.subr.bf16.mxu0 0
    %55 = vmatpush1.bf16.msra.mxu0 0
    %56 = vmatprep.subr.bf16.mxu0 0
    %57 = vmatpush1.bf16.msra.mxu0 0
    %58 = vmatprep.subr.bf16.mxu0 0
    %59 = vmatpush1.bf16.msra.mxu0 0
    %60 = vmatprep.subr.bf16.mxu0 0
    %61 = vmatpush1.bf16.msra.mxu0 0
    %62 = vmatprep.subr.bf16.mxu0 0
    %63 = vmatpush1.bf16.msra.mxu0 0
    %64 = vmatprep.subr.bf16.mxu0 0
    %65 = vmatpush1.bf16.msra.mxu0 0
    %66 = vmatprep.subr.bf16.mxu0 0
    %67 = vmatpush1.bf16.msra.mxu0 0
    %68 = vmatprep.subr.bf16.mxu0 0
    %69 = vmatpush1.bf16.msra.mxu0 0
    %70 = vmatprep.subr.bf16.mxu0 0
    %71 = vmatpush1.bf16.msra.mxu0 0
    %72 = vmatprep.subr.bf16.mxu0 0
    %73 = vmatpush1.bf16.msra.mxu0 0
    %74 = vmatprep.subr.bf16.mxu0 0
    %75 = vmatpush1.bf16.msra.mxu0 0
    %76 = vmatprep.mubr.bf16.mxu0 0
    %77 = vmatmul.mubr.bf16.gmra.mrb[0].mxu0 %v42
    %v78 = vpop.f32.mrb[0].mxu0
    %v79 = vadd.f32 %v26, %v78
    %v80 = vpop.f32.mrb[0].mxu0
    %v81 = vpop.f32.mrb[0].mxu0
    %v82 = vpop.f32.mrb[0].mxu0
    %83 = vdwg.mxu0
    %84 = vst [vmem:[#allocation2] sm:$0x3] %v79
    // Predicated region
    $region14: #{linear_classifier_forward.1} parent=1 // pred_check
      _
    $region15: #{linear_classifier_forward.1} parent=1 // pred_check_branch
      %86 = sbr.rel (0) target = $region17
    $region16: #{linear_classifier_forward.1} parent=1 // pred_region
      %s88 = ssub.s32 32, 32
      %89 = vsyncadd [#allocation3], %s88
      %s91 = sshll.u32 [#allocation2], 4
      %s92 = int_to_ptr.vmem [resolvable:$true] %s91
      %94 = dma.vmem_to_hbm [thread:$0]  %s92, 32, %s3, [#allocation3]
    $region17: #{linear_classifier_forward.1} parent=1 // pred_fallthru
      _
    // Predicated region
    $region18: #{linear_classifier_forward.1} parent=1 // pred_check
      _
    $region19: #{linear_classifier_forward.1} parent=1 // pred_check_branch
      %96 = sbr.rel (0) target = $region21
    $region20: #{linear_classifier_forward.1} parent=1 // pred_region
      %97 = dma.done [#allocation3], 32
    $region21: #{linear_classifier_forward.1} parent=1 // pred_fallthru
      _
    %98 = vsyncpa [#allocation3], 1

</llo_original>
